<compile_context>
chip_gen: v5e
topology: v5e:2x2
jax: 0.10.0
libtpu: 0.0.40
codegen_flags: <defaults>
</compile_context>

<pallas_src>
import jax
import jax.numpy as jnp
from jax.experimental import pallas as pl
from jax.experimental.pallas import tpu as pltpu


def _pi_value_head_kernel(pi_ref, inv_ref, val_ref, w_ref, mult_ref, b_ref,
                          pi_out_ref, v_out_ref):
    # --- pi masking: pure VPU elementwise; this is the HBM-bound part ---------
    pi_f32 = pi_ref[...].astype(jnp.float32)
    pi_out_ref[...] = jnp.where(inv_ref[...], jnp.float32(-jnp.inf), pi_f32)

    # --- value head: per-row mat-vec on VPU + XLU lane reduction --------------
    # Recomputed for every action tile j (cheap, rides free slots while the kernel
    # is DMA-bound); writes are idempotent, so the (i, 0) v_out block is correct
    # no matter how the parallel grid is split across TensorCores.
    prod = val_ref[...].astype(jnp.float32) * w_ref[...].astype(jnp.float32)   # (TB, F)
    v = jnp.sum(prod, axis=-1, keepdims=True)                                  # (TB, 1)
    v_out_ref[...] = (v + b_ref[0]) * mult_ref[...]                            # (TB, 1)


def _vmem_budget_bytes():
    """Generation-aware budgets: (double-buffered tile budget, vmem_limit_bytes)."""
    try:
        phys = int(getattr(pltpu.get_tpu_info(), "vmem_capacity_bytes",
                           64 * 1024 * 1024))
    except Exception:
        phys = 64 * 1024 * 1024                      # conservative (v7x per-TC size)
    # v5e/v6e: 128 MiB -> limit 96 MiB, tile budget 48 MiB
    # v7x:      64 MiB -> limit 48 MiB, tile budget 24 MiB
    vmem_limit = min((phys * 3) // 4, 96 * 1024 * 1024)
    tile_budget = vmem_limit // 2
    return tile_budget, vmem_limit


def _choose_tiles(B, A, F, pi_bytes, val_bytes, tile_budget):
    # Action tile: full A when small enough (block dim == array dim is always legal),
    # otherwise a 128-multiple; the ragged tail tile is handled by Pallas.
    TA = A if A <= 2048 else 2048
    # Double-buffered per-row footprint: pi in + bool mask + f32 pi out
    # + value in / f32 cast + small vectors.
    per_row = 2 * (TA * (pi_bytes + 1 + 4) + F * (val_bytes + 4) + 16)
    tb = tile_budget // max(per_row, 1)
    tb = (tb // 32) * 32              # multiple of 32: safe sublane packing for the 1-byte mask
    tb = max(32, min(tb, 1024))       # TA <= 2048 guarantees the 32-row floor fits the budget
    TB = B if B <= tb else tb
    return TB, TA


def pi_value_head(pi, invalid, value, w, b, multiplier):
    B, A = pi.shape
    _, F = value.shape

    tile_budget, vmem_limit = _vmem_budget_bytes()
    TB, TA = _choose_tiles(B, A, F, pi.dtype.itemsize, value.dtype.itemsize,
                           tile_budget)

    mult_col = multiplier.reshape(B, 1).astype(jnp.float32)
    w2 = w.reshape(1, F).astype(jnp.float32)
    b1 = b.reshape(1).astype(jnp.float32)

    grid = (pl.cdiv(B, TB), pl.cdiv(A, TA))

    pi_out, v_col = pl.pallas_call(
        _pi_value_head_kernel,
        grid=grid,
        in_specs=[
            pl.BlockSpec((TB, TA), lambda i, j: (i, j)),          # pi
            pl.BlockSpec((TB, TA), lambda i, j: (i, j)),          # invalid mask (bool, 1 B/elem)
            pl.BlockSpec((TB, F), lambda i, j: (i, 0)),           # value (fetched once per row tile)
            pl.BlockSpec((1, F), lambda i, j: (0, 0)),            # linear weight
            pl.BlockSpec((TB, 1), lambda i, j: (i, 0)),           # multiplier (column)
            pl.BlockSpec(memory_space=pltpu.MemorySpace.SMEM),    # linear bias (scalar)
        ],
        out_specs=(
            pl.BlockSpec((TB, TA), lambda i, j: (i, j)),          # masked pi
            pl.BlockSpec((TB, 1), lambda i, j: (i, 0)),           # v column (resident across j)
        ),
        out_shape=(
            jax.ShapeDtypeStruct((B, A), jnp.float32),
            jax.ShapeDtypeStruct((B, 1), jnp.float32),
        ),
        compiler_params=pltpu.CompilerParams(
            dimension_semantics=("parallel", "parallel"),
            vmem_limit_bytes=vmem_limit,
        ),
    )(pi, invalid, value, w2, mult_col, b1)

    # (B, 1) -> (1, B): tiny (4*B bytes), layout-trivial.
    v_out = v_col.reshape(1, B)
    return pi_out, v_out


def _reference(pi, invalid, value, w, b, multiplier):
    pi_f = pi.astype(jnp.float32)
    pi_out = jnp.where(invalid, jnp.float32(-jnp.inf), pi_f)
    v = value.astype(jnp.float32) @ w.astype(jnp.float32).T + b.astype(jnp.float32)  # (B, 1)
    v = v.T * multiplier.astype(jnp.float32)                                         # (1, B)
    return pi_out, v


if __name__ == "__main__":
    B, A, F = 4, 64, 32   # batch, num actions (pi width), in_feat

    key = jax.random.PRNGKey(0)
    k_pi, k_inv, k_val, k_w, k_b, k_m = jax.random.split(key, 6)

    # deterministic example inputs (pi/value in bf16 to exercise the .float() casts)
    pi = jax.random.normal(k_pi, (B, A), dtype=jnp.float32).astype(jnp.bfloat16)
    invalid = jax.random.bernoulli(k_inv, 0.3, (B, A))                     # bool mask
    value = jax.random.normal(k_val, (B, F), dtype=jnp.float32).astype(jnp.bfloat16)
    multiplier = jnp.where(jax.random.bernoulli(k_m, 0.5, (B,)), 1.0, -1.0).astype(jnp.float32)

    # deterministic parameters for nn.Linear(in_feat=F, out_features=1)
    bound = 1.0 / float(F) ** 0.5
    w = jax.random.uniform(k_w, (1, F), jnp.float32, -bound, bound)
    b = jax.random.uniform(k_b, (1,), jnp.float32, -bound, bound)

    pi_out, v_out = pi_value_head(pi, invalid, value, w, b, multiplier)
    jax.block_until_ready((pi_out, v_out))

    pi_ref, v_ref = _reference(pi, invalid, value, w, b, multiplier)
    assert pi_out.shape == (B, A) and pi_out.dtype == jnp.float32
    assert v_out.shape == (1, B) and v_out.dtype == jnp.float32
    assert bool(jnp.allclose(pi_out, pi_ref, equal_nan=True))
    assert bool(jnp.allclose(v_out, v_ref, rtol=1e-5, atol=1e-5))

    print("KERNEL_OK")
</pallas_src>

<mosaic_0001>
module attributes {stable_mosaic.version = 11 : i64} {
  func.func @_pi_value_head_kernel(%arg0: i32, %arg1: i32, %arg2: memref<4x64xbf16, #tpu.memory_space<vmem>>, %arg3: memref<4x64xi32, #tpu.memory_space<vmem>>, %arg4: memref<4x32xbf16, #tpu.memory_space<vmem>>, %arg5: memref<1x32xf32, #tpu.memory_space<vmem>>, %arg6: memref<4x1xf32, #tpu.memory_space<vmem>>, %arg7: memref<1xf32, #tpu.memory_space<smem>>, %arg8: memref<4x64xf32, #tpu.memory_space<vmem>>, %arg9: memref<4x1xf32, #tpu.memory_space<vmem>>) attributes {dimension_semantics = [#tpu.dimension_semantics<parallel>, #tpu.dimension_semantics<parallel>], iteration_bounds = array<i64: 1, 1>, scalar_prefetch = 0 : i64, scratch_operands = 0 : i64, tpu.core_type = #tpu.core_type<tc>, window_params = [{transform_indices = @transform_0, window_bounds = array<i64: 4, 64>}, {transform_indices = @transform_1, window_bounds = array<i64: 4, 64>}, {transform_indices = @transform_2, window_bounds = array<i64: 4, 32>}, {pipeline_mode = #tpu.pipeline_mode<synchronous>, transform_indices = @transform_3, window_bounds = array<i64: 1, 32>}, {transform_indices = @transform_4, window_bounds = array<i64: 4, 1>}, {transform_indices = @transform_5, window_bounds = array<i64: 1>}, {transform_indices = @transform_6, window_bounds = array<i64: 4, 64>}, {transform_indices = @transform_7, window_bounds = array<i64: 4, 1>}]} {
    %c0 = arith.constant 0 : index
    %c0_0 = arith.constant 0 : index
    %0 = vector.load %arg2[%c0, %c0_0] : memref<4x64xbf16, #tpu.memory_space<vmem>>, vector<4x64xbf16>
    %1 = arith.extf %0 : vector<4x64xbf16> to vector<4x64xf32>
    %c0_1 = arith.constant 0 : index
    %c0_2 = arith.constant 0 : index
    %2 = vector.load %arg3[%c0_1, %c0_2] : memref<4x64xi32, #tpu.memory_space<vmem>>, vector<4x64xi32>
    %cst = arith.constant dense<0> : vector<4x64xi32>
    %3 = arith.cmpi ne, %2, %cst : vector<4x64xi32>
    %cst_3 = arith.constant 0xFF800000 : f32
    %4 = vector.broadcast %cst_3 : f32 to vector<4x64xf32>
    %5 = arith.select %3, %4, %1 : vector<4x64xi1>, vector<4x64xf32>
    %c0_4 = arith.constant 0 : index
    %c0_5 = arith.constant 0 : index
    %6 = vector.load %arg8[%c0_4, %c0_5] : memref<4x64xf32, #tpu.memory_space<vmem>>, vector<4x64xf32>
    tpu.vector_store %arg8[%c0_4, %c0_5], %5 {strides = array<i32>} : memref<4x64xf32, #tpu.memory_space<vmem>>, vector<4x64xf32>,
    %c0_6 = arith.constant 0 : index
    %c0_7 = arith.constant 0 : index
    %7 = vector.load %arg4[%c0_6, %c0_7] : memref<4x32xbf16, #tpu.memory_space<vmem>>, vector<4x32xbf16>
    %8 = arith.extf %7 : vector<4x32xbf16> to vector<4x32xf32>
    %c0_8 = arith.constant 0 : index
    %c0_9 = arith.constant 0 : index
    %9 = vector.load %arg5[%c0_8, %c0_9] : memref<1x32xf32, #tpu.memory_space<vmem>>, vector<1x32xf32>
    %10 = vector.broadcast %9 : vector<1x32xf32> to vector<4x32xf32>
    %11 = arith.mulf %8, %10 : vector<4x32xf32>
    %cst_10 = arith.constant dense<0.000000e+00> : vector<4xf32>
    %12 = vector.multi_reduction <add>, %11, %cst_10 [1] : vector<4x32xf32> to vector<4xf32>
    %13 = vector.shape_cast %12 : vector<4xf32> to vector<4x1xf32>
    %c0_11 = arith.constant 0 : index
    %14 = memref.load %arg7[%c0_11] : memref<1xf32, #tpu.memory_space<smem>>
    %15 = vector.broadcast %14 : f32 to vector<4x1xf32>
    %16 = arith.addf %13, %15 : vector<4x1xf32>
    %c0_12 = arith.constant 0 : index
    %c0_13 = arith.constant 0 : index
    %17 = vector.load %arg6[%c0_12, %c0_13] : memref<4x1xf32, #tpu.memory_space<vmem>>, vector<4x1xf32>
    %18 = arith.mulf %16, %17 : vector<4x1xf32>
    %c0_14 = arith.constant 0 : index
    %c0_15 = arith.constant 0 : index
    %19 = vector.load %arg9[%c0_14, %c0_15] : memref<4x1xf32, #tpu.memory_space<vmem>>, vector<4x1xf32>
    tpu.vector_store %arg9[%c0_14, %c0_15], %18 {strides = array<i32>} : memref<4x1xf32, #tpu.memory_space<vmem>>, vector<4x1xf32>,
    return
  }
  func.func @transform_0(%arg0: i32, %arg1: i32) -> (i32, i32) {
    %c0_i32 = arith.constant 0 : i32
    return %arg0, %arg1 : i32, i32
  }
  func.func @transform_1(%arg0: i32, %arg1: i32) -> (i32, i32) {
    %c0_i32 = arith.constant 0 : i32
    return %arg0, %arg1 : i32, i32
  }
  func.func @transform_2(%arg0: i32, %arg1: i32) -> (i32, i32) {
    %c0_i32 = arith.constant 0 : i32
    %c0_i32_0 = arith.constant 0 : i32
    return %arg0, %c0_i32 : i32, i32
  }
  func.func @transform_3(%arg0: i32, %arg1: i32) -> (i32, i32) {
    %c0_i32 = arith.constant 0 : i32
    %c0_i32_0 = arith.constant 0 : i32
    %c0_i32_1 = arith.constant 0 : i32
    return %c0_i32, %c0_i32_0 : i32, i32
  }
  func.func @transform_4(%arg0: i32, %arg1: i32) -> (i32, i32) {
    %c0_i32 = arith.constant 0 : i32
    %c0_i32_0 = arith.constant 0 : i32
    return %arg0, %c0_i32 : i32, i32
  }
  func.func @transform_5(%arg0: i32, %arg1: i32) -> i32 {
    %c0_i32 = arith.constant 0 : i32
    %c0_i32_0 = arith.constant 0 : i32
    return %c0_i32 : i32
  }
  func.func @transform_6(%arg0: i32, %arg1: i32) -> (i32, i32) {
    %c0_i32 = arith.constant 0 : i32
    return %arg0, %arg1 : i32, i32
  }
  func.func @transform_7(%arg0: i32, %arg1: i32) -> (i32, i32) {
    %c0_i32 = arith.constant 0 : i32
    %c0_i32_0 = arith.constant 0 : i32
    return %arg0, %c0_i32 : i32, i32
  }
}

</mosaic_0001>

<llo_original>
// kernel: tpu_custom_call.1
$region0: #{tpu_custom_call.1}
  #allocation0 [shape = 'u32[]', space=smem, size = 0x4, offset = 0x4, fixed_abs, tag = 'smem constant byte address 0x4 - core index']
  #allocation1 [shape = 'u32[72,128]{1,0:T(1,128)}', space=vmem, size = 0x9000, scoped, tag = 'internal scratch']
  #allocation2 [shape = 'f32[1]{0:T(128)S(6)}', space=smem, size = 0x200, scoped, tag = 'scoped memory for tpu_custom_call.1']
  %s0 = inlined_call_operand.vmem [shape: bf16[4,64], index: 0, kind: input, shape index: {}]
  %s1 = inlined_call_operand.vmem [shape: s32[4,64], index: 1, kind: input, shape index: {}]
  %s2 = inlined_call_operand.vmem [shape: bf16[4,32], index: 2, kind: input, shape index: {}]
  %s3 = inlined_call_operand.vmem [shape: f32[1,32], index: 3, kind: input, shape index: {}]
  %s4 = inlined_call_operand.vmem [shape: f32[4,1], index: 4, kind: input, shape index: {}]
  %s5 = inlined_call_operand.<no memory space> [shape: f32[1], index: 5, kind: input, shape index: {}]
  %s6 = inlined_call_operand.hbm [shape: f32[4,64], index: 6, kind: output, shape index: {0}]
  %s7 = inlined_call_operand.vmem [shape: f32[4,1], index: 7, kind: output, shape index: {1}]
  %8 = xla_tuple %s6, %s7
  %s9 = sld [smem:[#allocation0]]
  $region42: #{tpu_custom_call.1} parent=0
    _
  %s11 = ssub.s32 1, %s9
  %s12 = scalar_select 0, %s11, %s9
  %13 = sst [smem:[#allocation2]] %s5
  $region1: #{tpu_custom_call.1} parent=0
    #allocation3 [shape = 'u8[2048]{0}', space=vmem, size = 0x800, scoped, tag = 'output window, operand 0, single buffered']
    #allocation4 [shape = 's32[1]{0}', space=sflag, size = 0x4, scoped, tag = 'scoped memory for tpu_custom_call.1']
    %14 = vsyncpa [#allocation4], 0
    // Predicated region
    $region2: #{tpu_custom_call.1} parent=1 // pred_check
      _
    $region3: #{tpu_custom_call.1} parent=1 // pred_check_branch
      %16 = sbr.rel (0) target = $region5
    $region4: #{tpu_custom_call.1} parent=1 // pred_region
      _
    $region5: #{tpu_custom_call.1} parent=1 // pred_fallthru
      _
    // Predicated region
    $region6: #{tpu_custom_call.1} parent=1 // pred_check
      _
    $region7: #{tpu_custom_call.1} parent=1 // pred_check_branch
      %18 = sbr.rel (0) target = $region9
    $region8: #{tpu_custom_call.1} parent=1 // pred_region
      _
    $region9: #{tpu_custom_call.1} parent=1 // pred_fallthru
      _
    // Predicated region
    $region10: #{tpu_custom_call.1} parent=1 // pred_check
      _
    $region11: #{tpu_custom_call.1} parent=1 // pred_check_branch
      %20 = sbr.rel (0) target = $region13
    $region12: #{tpu_custom_call.1} parent=1 // pred_region
      _
    $region13: #{tpu_custom_call.1} parent=1 // pred_fallthru
      _
    // Predicated region
    $region14: #{tpu_custom_call.1} parent=1 // pred_check
      _
    $region15: #{tpu_custom_call.1} parent=1 // pred_check_branch
      %22 = sbr.rel (0) target = $region17
    $region16: #{tpu_custom_call.1} parent=1 // pred_region
      _
    $region17: #{tpu_custom_call.1} parent=1 // pred_fallthru
      _
    // Predicated region
    $region18: #{tpu_custom_call.1} parent=1 // pred_check
      _
    $region19: #{tpu_custom_call.1} parent=1 // pred_check_branch
      %24 = sbr.rel (0) target = $region21
    $region20: #{tpu_custom_call.1} parent=1 // pred_region
      _
    $region21: #{tpu_custom_call.1} parent=1 // pred_fallthru
      _
    // Predicated region
    $region22: #{tpu_custom_call.1} parent=1 // pred_check
      _
    $region23: #{tpu_custom_call.1} parent=1 // pred_check_branch
      %26 = sbr.rel (0) target = $region25
    $region24: #{tpu_custom_call.1} parent=1 // pred_region
      _
    $region25: #{tpu_custom_call.1} parent=1 // pred_fallthru
      _
    %v27 = vld [vmem:[%s0] sm:$0x3]
    %v28 = vunpack.c.l.bf16 %v27
    %v29 = vld [vmem:[%s1] sm:$0xf]
    %vm30 = vcmp.ne.s32.totalorder %v29, 0
    %v31 = vsel %vm30, -inf, %v28
    %vm32 = vcmask 519168
    %33 = vst.msk [vmem:[#allocation3] sm:$0xf] %vm32, %v31
    %v34 = vld [vmem:[%s2] sm:$0x3]
    %v35 = vunpack.c.l.bf16 %v34
    %v36 = vld [vmem:[%s3] sm:$0x1]
    %v38 = vperm.slane %v36, 0
    %v40 = vmul.f32 %v35, %v38
    %vm41 = vcmask 257024
    %v42 = vsel %vm41, %v40, 0.0
    %43 = vadd.xlane.f32.xlu0 %v42
    %v44 = vpop.xlane.xlu0 %43
    %s45 = sld [smem:[#allocation2]]
    %v46 = vstv %s45
    %v47 = vadd.f32 %v44, %v46
    %v48 = vld [vmem:[%s4] sm:$0xf]
    %v49 = vmul.f32 %v47, %v48
    %vm50 = vcmask 3072
    %51 = vst.msk [vmem:[%s7] sm:$0xf] %vm50, %v49
    // Predicated region
    $region26: #{tpu_custom_call.1} parent=1 // pred_check
      _
    $region27: #{tpu_custom_call.1} parent=1 // pred_check_branch
      %53 = sbr.rel (0) target = $region29
    $region28: #{tpu_custom_call.1} parent=1 // pred_region
      %55 = vsyncadd [#allocation4], 0
      %s57 = sshll.u32 [#allocation3], 4
      %s58 = int_to_ptr.vmem [resolvable:$true] %s57
      %s59 = sshll.u32 %s6, 4
      %s60 = int_to_ptr.hbm [resolvable:$true] %s59
      %62 = dma.vmem_to_hbm [thread:$0]  %s58, 64, %s60, [#allocation4]
    $region29: #{tpu_custom_call.1} parent=1 // pred_fallthru
      _
    // Predicated region
    $region30: #{tpu_custom_call.1} parent=1 // pred_check
      _
    $region31: #{tpu_custom_call.1} parent=1 // pred_check_branch
      %64 = sbr.rel (0) target = $region33
    $region32: #{tpu_custom_call.1} parent=1 // pred_region
      _
    $region33: #{tpu_custom_call.1} parent=1 // pred_fallthru
      _
    // Predicated region
    $region34: #{tpu_custom_call.1} parent=1 // pred_check
      _
    $region35: #{tpu_custom_call.1} parent=1 // pred_check_branch
      %66 = sbr.rel (0) target = $region37
    $region36: #{tpu_custom_call.1} parent=1 // pred_region
      %68 = dma.done [#allocation4], 64
    $region37: #{tpu_custom_call.1} parent=1 // pred_fallthru
      _
    // Predicated region
    $region38: #{tpu_custom_call.1} parent=1 // pred_check
      _
    $region39: #{tpu_custom_call.1} parent=1 // pred_check_branch
      %70 = sbr.rel (0) target = $region41
    $region40: #{tpu_custom_call.1} parent=1 // pred_region
      _
    $region41: #{tpu_custom_call.1} parent=1 // pred_fallthru
      _
    %71 = vsyncpa [#allocation4], 1

</llo_original>
